<compile_context>
chip_gen: v7x
topology: tpu7x:2x2x1
jax: 0.10.0
libtpu: 0.0.40
codegen_flags: <defaults>
</compile_context>

<pallas_src>
import functools

import jax
import jax.numpy as jnp
from jax import lax
from jax.experimental import pallas as pl
from jax.experimental.pallas import tpu as pltpu


# ---------------------------------------------------------------------------
# Kernels
# ---------------------------------------------------------------------------

def _linear_kernel(x_ref, wt_ref, b_ref, o_ref):
    """y = x @ W^T + b. Batch-tiled: x_ref [tb, F], wt_ref [F, D], out [tb, D]."""
    x16 = x_ref[...].astype(jnp.bfloat16)
    w16 = wt_ref[...].astype(jnp.bfloat16)
    y = jnp.dot(x16, w16, preferred_element_type=jnp.float32)
    y = y + b_ref[...].astype(jnp.float32)
    o_ref[...] = y.astype(o_ref.dtype)


def _linear_bn_kernel(x_ref, wt_ref, gamma_ref, beta_ref, o_ref, *, eps: float):
    """Linear (bias omitted: cancelled by mean subtraction) + BatchNorm1d
    (training-mode biased batch statistics). Single block over the full batch
    so mean/var are exact."""
    x16 = x_ref[...].astype(jnp.bfloat16)
    w16 = wt_ref[...].astype(jnp.bfloat16)
    y = jnp.dot(x16, w16, preferred_element_type=jnp.float32)

    mean = jnp.mean(y, axis=0, keepdims=True)
    centered = y - mean
    var = jnp.mean(centered * centered, axis=0, keepdims=True)
    y = centered * lax.rsqrt(var + eps)
    y = y * gamma_ref[...].astype(jnp.float32) + beta_ref[...].astype(jnp.float32)

    o_ref[...] = y.astype(o_ref.dtype)


# ---------------------------------------------------------------------------
# Wrapper
# ---------------------------------------------------------------------------

def _vmem_limit(working_set_bytes: int) -> int:
    # Ask for ~2x the working set (double-buffers + compiler scratch headroom),
    # clamped to [4 MiB, 48 MiB] -- 48 MiB stays under v7x's 64 MiB per-TC VMEM.
    return int(min(48 << 20, max(4 << 20, 2 * working_set_bytes)))


def feat_bottleneck_forward(x, weight_t, bias, bn_gamma, bn_beta,
                            *, type="ori", eps=1e-5):
    """x: [B, F]; weight_t: [F, D] (nn.Linear weight pre-transposed once at
    init); bias / bn_gamma / bn_beta: [D]."""
    B, F = x.shape
    Fw, D = weight_t.shape
    assert Fw == F, (Fw, F)
    itemsize = x.dtype.itemsize

    g2 = bn_gamma.reshape(1, D)
    be2 = bn_beta.reshape(1, D)
    out_shape = jax.ShapeDtypeStruct((B, D), x.dtype)

    if type == "bn":
        # BatchNorm needs full-batch statistics -> single block over B.
        # (If B*F ever outgrows VMEM, a K-tiled accumulator variant is needed;
        #  not required at these sizes.)
        cost = pl.CostEstimate(
            flops=int(2 * B * F * D + 8 * B * D),
            transcendentals=int(D),
            bytes_accessed=int(x.size * itemsize + weight_t.size * weight_t.dtype.itemsize
                               + 2 * D * 4 + B * D * itemsize))
        vmem = _vmem_limit(B * F * 4 + F * D * 4 + 3 * B * D * 4 + 4 * D * 4)
        return pl.pallas_call(
            functools.partial(_linear_bn_kernel, eps=eps),
            out_shape=out_shape,
            in_specs=[
                pl.BlockSpec((B, F), lambda: (0, 0)),
                pl.BlockSpec((F, D), lambda: (0, 0)),
                pl.BlockSpec((1, D), lambda: (0, 0)),
                pl.BlockSpec((1, D), lambda: (0, 0)),
            ],
            out_specs=pl.BlockSpec((B, D), lambda: (0, 0)),
            compiler_params=pltpu.CompilerParams(vmem_limit_bytes=vmem),
            cost_estimate=cost,
        )(x, weight_t, g2, be2)

    # type == 'ori': plain Linear, batch-tiled grid -> pipelined x/out DMAs and
    # megacore "parallel" sharding. tb is either the full batch or a multiple of 8.
    tb = B if B <= 512 else 512
    nb = pl.cdiv(B, tb)
    b2 = bias.reshape(1, D)
    cost = pl.CostEstimate(
        flops=int(2 * B * F * D),
        transcendentals=0,
        bytes_accessed=int(x.size * itemsize + weight_t.size * weight_t.dtype.itemsize
                           + D * 4 + B * D * itemsize))
    vmem = _vmem_limit(2 * (tb * F * 4 + tb * D * 4) + F * D * 4 + D * 4)
    return pl.pallas_call(
        _linear_kernel,
        out_shape=out_shape,
        grid=(nb,),
        in_specs=[
            pl.BlockSpec((tb, F), lambda i: (i, 0)),
            pl.BlockSpec((F, D), lambda i: (0, 0)),
            pl.BlockSpec((1, D), lambda i: (0, 0)),
        ],
        out_specs=pl.BlockSpec((tb, D), lambda i: (i, 0)),
        compiler_params=pltpu.CompilerParams(
            dimension_semantics=("parallel",),
            vmem_limit_bytes=vmem),
        cost_estimate=cost,
    )(x, weight_t, b2)


# ---------------------------------------------------------------------------
# Parameter init mirroring init_weights() for nn.Linear + nn.BatchNorm1d
# ---------------------------------------------------------------------------

def init_params(key, feature_dim, bottleneck_dim):
    k_w, k_g = jax.random.split(key)
    # Xavier (Glorot) normal for Linear weight [D, F], zeros for bias.
    std = (2.0 / (feature_dim + bottleneck_dim)) ** 0.5
    weight = std * jax.random.normal(k_w, (bottleneck_dim, feature_dim), jnp.float32)
    bias = jnp.zeros((bottleneck_dim,), jnp.float32)
    # BatchNorm affine: weight ~ N(1.0, 0.02), bias = 0.
    bn_gamma = 1.0 + 0.02 * jax.random.normal(k_g, (bottleneck_dim,), jnp.float32)
    bn_beta = jnp.zeros((bottleneck_dim,), jnp.float32)
    return weight, bias, bn_gamma, bn_beta


if __name__ == "__main__":
    feature_dim = 32
    bottleneck_dim = 256
    batch = 8

    key = jax.random.PRNGKey(0)
    k_x, k_p = jax.random.split(key)
    x = jax.random.normal(k_x, (batch, feature_dim), jnp.float32)
    weight, bias, bn_gamma, bn_beta = init_params(k_p, feature_dim, bottleneck_dim)
    # One-time (static) transpose of the Linear weight to [F, D]; done at init,
    # NOT per forward call.
    weight_t = jnp.transpose(weight)

    # type='ori' (module default): plain Linear.
    y_ori = feat_bottleneck_forward(x, weight_t, bias, bn_gamma, bn_beta, type="ori")
    jax.block_until_ready(y_ori)

    # type='bn': Linear followed by BatchNorm1d (training-mode batch stats).
    y_bn = feat_bottleneck_forward(x, weight_t, bias, bn_gamma, bn_beta, type="bn")
    jax.block_until_ready(y_bn)

    # Reference uses the same bf16 MXU operands with f32 accumulation.
    lin_ref = jnp.dot(x.astype(jnp.bfloat16), weight_t.astype(jnp.bfloat16),
                      preferred_element_type=jnp.float32)
    ref_ori = lin_ref + bias
    assert jnp.allclose(y_ori, ref_ori, atol=2e-3, rtol=2e-3), \
        float(jnp.max(jnp.abs(y_ori - ref_ori)))

    mu = ref_ori.mean(axis=0, keepdims=True)
    var = ((ref_ori - mu) ** 2).mean(axis=0, keepdims=True)
    ref_bn = (ref_ori - mu) / jnp.sqrt(var + 1e-5) * bn_gamma + bn_beta
    assert jnp.allclose(y_bn, ref_bn, atol=5e-3, rtol=5e-3), \
        float(jnp.max(jnp.abs(y_bn - ref_bn)))

    # Odd batch size: exercises the BN mean/var reductions with sublane padding.
    x5 = jax.random.normal(jax.random.PRNGKey(1), (5, feature_dim), jnp.float32)
    y_bn5 = feat_bottleneck_forward(x5, weight_t, bias, bn_gamma, bn_beta, type="bn")
    jax.block_until_ready(y_bn5)
    lin5 = jnp.dot(x5.astype(jnp.bfloat16), weight_t.astype(jnp.bfloat16),
                   preferred_element_type=jnp.float32) + bias
    mu5 = lin5.mean(axis=0, keepdims=True)
    var5 = ((lin5 - mu5) ** 2).mean(axis=0, keepdims=True)
    ref_bn5 = (lin5 - mu5) / jnp.sqrt(var5 + 1e-5) * bn_gamma + bn_beta
    assert jnp.allclose(y_bn5, ref_bn5, atol=5e-3, rtol=5e-3), \
        float(jnp.max(jnp.abs(y_bn5 - ref_bn5)))

    print("KERNEL_OK")
</pallas_src>

<mosaic_0001>
module attributes {stable_mosaic.version = 11 : i64} {
  func.func @_linear_kernel(%arg0: i32, %arg1: memref<8x32xf32, #tpu.memory_space<vmem>>, %arg2: memref<32x256xf32, #tpu.memory_space<vmem>>, %arg3: memref<1x256xf32, #tpu.memory_space<vmem>>, %arg4: memref<8x256xf32, #tpu.memory_space<vmem>>) attributes {dimension_semantics = [#tpu.dimension_semantics<parallel>], iteration_bounds = array<i64: 1>, scalar_prefetch = 0 : i64, scratch_operands = 0 : i64, tpu.core_type = #tpu.core_type<tc>, window_params = [{transform_indices = @transform_0, window_bounds = array<i64: 8, 32>}, {pipeline_mode = #tpu.pipeline_mode<synchronous>, transform_indices = @transform_1, window_bounds = array<i64: 32, 256>}, {pipeline_mode = #tpu.pipeline_mode<synchronous>, transform_indices = @transform_2, window_bounds = array<i64: 1, 256>}, {transform_indices = @transform_3, window_bounds = array<i64: 8, 256>}]} {
    %c0 = arith.constant 0 : index
    %c0_0 = arith.constant 0 : index
    %0 = vector.load %arg1[%c0, %c0_0] : memref<8x32xf32, #tpu.memory_space<vmem>>, vector<8x32xf32>
    %1 = arith.truncf %0 : vector<8x32xf32> to vector<8x32xbf16>
    %c0_1 = arith.constant 0 : index
    %c0_2 = arith.constant 0 : index
    %2 = vector.load %arg2[%c0_1, %c0_2] : memref<32x256xf32, #tpu.memory_space<vmem>>, vector<32x256xf32>
    %3 = arith.truncf %2 : vector<32x256xf32> to vector<32x256xbf16>
    %cst = arith.constant dense<0.000000e+00> : vector<8x256xf32>
    %4 = tpu.matmul %1, %3, %cst {dimension_numbers = #tpu.dot_dimension_numbers<[1], [0], [0], [1], [0, 0, 1, 1], [], []>} : vector<8x32xbf16>, vector<32x256xbf16>, vector<8x256xf32> -> vector<8x256xf32>
    %c0_3 = arith.constant 0 : index
    %c0_4 = arith.constant 0 : index
    %5 = vector.load %arg3[%c0_3, %c0_4] : memref<1x256xf32, #tpu.memory_space<vmem>>, vector<1x256xf32>
    %6 = vector.broadcast %5 : vector<1x256xf32> to vector<8x256xf32>
    %7 = arith.addf %4, %6 : vector<8x256xf32>
    %c0_5 = arith.constant 0 : index
    %c0_6 = arith.constant 0 : index
    %8 = vector.load %arg4[%c0_5, %c0_6] : memref<8x256xf32, #tpu.memory_space<vmem>>, vector<8x256xf32>
    tpu.vector_store %arg4[%c0_5, %c0_6], %7 {strides = array<i32>} : memref<8x256xf32, #tpu.memory_space<vmem>>, vector<8x256xf32>,
    return
  }
  func.func @transform_0(%arg0: i32) -> (i32, i32) {
    %c0_i32 = arith.constant 0 : i32
    %c0_i32_0 = arith.constant 0 : i32
    return %arg0, %c0_i32 : i32, i32
  }
  func.func @transform_1(%arg0: i32) -> (i32, i32) {
    %c0_i32 = arith.constant 0 : i32
    %c0_i32_0 = arith.constant 0 : i32
    %c0_i32_1 = arith.constant 0 : i32
    return %c0_i32, %c0_i32_0 : i32, i32
  }
  func.func @transform_2(%arg0: i32) -> (i32, i32) {
    %c0_i32 = arith.constant 0 : i32
    %c0_i32_0 = arith.constant 0 : i32
    %c0_i32_1 = arith.constant 0 : i32
    return %c0_i32, %c0_i32_0 : i32, i32
  }
  func.func @transform_3(%arg0: i32) -> (i32, i32) {
    %c0_i32 = arith.constant 0 : i32
    %c0_i32_0 = arith.constant 0 : i32
    return %arg0, %c0_i32 : i32, i32
  }
}

</mosaic_0001>

<llo_original>
// kernel: tpu_custom_call.1
$region0: #{tpu_custom_call.1}
  #allocation0 [shape = 'u32[]', space=smem, size = 0x4, offset = 0x4, fixed_abs, tag = 'smem constant byte address 0x4 - core index']
  #allocation1 [shape = 'u32[144,128]{1,0:T(1,128)}', space=vmem, size = 0x12000, scoped, tag = 'internal scratch']
  %s0 = inlined_call_operand.hbm [shape: f32[8,32], index: 0, kind: input, shape index: {}]
  %s1 = inlined_call_operand.hbm [shape: f32[32,256], index: 1, kind: input, shape index: {}]
  %s2 = inlined_call_operand.vmem [shape: f32[1,256], index: 2, kind: input, shape index: {}]
  %s3 = inlined_call_operand.hbm [shape: f32[8,256], index: 3, kind: output, shape index: {}]
  %s4 = sld [smem:[#allocation0]]
  $region30: #{tpu_custom_call.1} parent=0
    _
  %s6 = ssub.s32 1, %s4
  %s7 = scalar_select 0, %s6, %s4
  $region1: #{tpu_custom_call.1} parent=0
    #allocation2 [shape = 'u8[4096]{0}', space=vmem, size = 0x1000, scoped, tag = 'input window, operand 0, single buffered']
    #allocation3 [shape = 's32[1]{0}', space=sflag, size = 0x4, scoped, tag = 'scoped memory for tpu_custom_call.1']
    #allocation4 [shape = 's32[1]{0}', space=sflag, size = 0x4, scoped, tag = 'scoped memory for tpu_custom_call.1']
    #allocation5 [shape = 'u8[32768]{0}', space=vmem, size = 0x8000, scoped, tag = 'input window, operand 1, single buffered']
    #allocation6 [shape = 's32[1]{0}', space=sflag, size = 0x4, scoped, tag = 'scoped memory for tpu_custom_call.1']
    #allocation7 [shape = 'u8[8192]{0}', space=vmem, size = 0x2000, scoped, tag = 'output window, operand 0, single buffered']
    %8 = vsyncpa [#allocation3], 0
    %9 = vsyncpa [#allocation6], 0
    %10 = vsyncpa [#allocation4], 0
    // Predicated region
    $region2: #{tpu_custom_call.1} parent=1 // pred_check
      _
    $region3: #{tpu_custom_call.1} parent=1 // pred_check_branch
      %12 = sbr.rel (0) target = $region5
    $region4: #{tpu_custom_call.1} parent=1 // pred_region
      %s14 = ssub.s32 128, 128
      %15 = vsyncadd [#allocation3], %s14
      %s17 = sshll.u32 [#allocation2], 4
      %s18 = int_to_ptr.vmem [resolvable:$true] %s17
      %20 = dma.hbm_to_vmem [thread:$0]  %s0, 128, %s18, [#allocation3]
    $region5: #{tpu_custom_call.1} parent=1 // pred_fallthru
      _
    // Predicated region
    $region6: #{tpu_custom_call.1} parent=1 // pred_check
      _
    $region7: #{tpu_custom_call.1} parent=1 // pred_check_branch
      %22 = sbr.rel (0) target = $region9
    $region8: #{tpu_custom_call.1} parent=1 // pred_region
      %s24 = ssub.s32 1024, 1024
      %25 = vsyncadd [#allocation6], %s24
      %s26 = sshll.u32 [#allocation5], 4
      %s27 = int_to_ptr.vmem [resolvable:$true] %s26
      %32 = dma.hbm_to_vmem [thread:$0]  %s1, 1024, %s27, [#allocation6], 256, 256, 16
    $region9: #{tpu_custom_call.1} parent=1 // pred_fallthru
      _
    // Predicated region
    $region10: #{tpu_custom_call.1} parent=1 // pred_check
      _
    $region11: #{tpu_custom_call.1} parent=1 // pred_check_branch
      %34 = sbr.rel (0) target = $region13
    $region12: #{tpu_custom_call.1} parent=1 // pred_region
      _
    $region13: #{tpu_custom_call.1} parent=1 // pred_fallthru
      _
    // Predicated region
    $region14: #{tpu_custom_call.1} parent=1 // pred_check
      _
    $region15: #{tpu_custom_call.1} parent=1 // pred_check_branch
      %36 = sbr.rel (0) target = $region17
    $region16: #{tpu_custom_call.1} parent=1 // pred_region
      %37 = dma.done [#allocation3], 128
    $region17: #{tpu_custom_call.1} parent=1 // pred_fallthru
      _
    // Predicated region
    $region18: #{tpu_custom_call.1} parent=1 // pred_check
      _
    $region19: #{tpu_custom_call.1} parent=1 // pred_check_branch
      %39 = sbr.rel (0) target = $region21
    $region20: #{tpu_custom_call.1} parent=1 // pred_region
      %40 = dma.done [#allocation6], 1024
    $region21: #{tpu_custom_call.1} parent=1 // pred_fallthru
      _
    %v42 = vld [vmem:[#allocation2] sm:$0xff]
    %v43 = vpack.c.bf16 %v42, %v42
    %v44 = vld [vmem:[#allocation5] sm:$0xff]
    %v45 = vld [vmem:[#allocation5 + $0x8] sm:$0xff]
    %v46 = vld [vmem:[#allocation5 + $0x10] sm:$0xff]
    %v47 = vld [vmem:[#allocation5 + $0x18] sm:$0xff]
    %v48 = vld [vmem:[#allocation5 + $0x20] sm:$0xff]
    %v49 = vld [vmem:[#allocation5 + $0x28] sm:$0xff]
    %v50 = vld [vmem:[#allocation5 + $0x30] sm:$0xff]
    %v51 = vld [vmem:[#allocation5 + $0x38] sm:$0xff]
    %v52 = vpack.c.bf16 %v46, %v44
    %v53 = vpack.c.bf16 %v47, %v45
    %v54 = vpack.c.bf16 %v50, %v48
    %v55 = vpack.c.bf16 %v51, %v49
    %v56 = vld [vmem:[%s2] sm:$0x3]
    %v58 = vlaneseq
    %v59 = vshrl.u32 %v58, 7
    %v60 = vsub.s32 0, %v59
    %v61 = vrot.slane %v56, %v60
    %v62 = vlaneseq
    %v63 = vshrl.u32 %v62, 7
    %v64 = vsub.s32 1, %v63
    %v65 = vrot.slane %v56, %v64
    %vm68 = vcmask 261120
    %v70 = vsel %vm68, %v43, 0
    %72 = vmatprep.subr.bf16.mxu0 %v53
    %73 = vmatpush1.bf16.msra.mxu0 %v52
    %74 = vmatprep.subr.bf16.mxu0 %v55
    %75 = vmatpush1.bf16.msra.mxu0 %v54
    %76 = vmatprep.subr.bf16.mxu0 0
    %77 = vmatpush1.bf16.msra.mxu0 0
    %78 = vmatprep.subr.bf16.mxu0 0
    %79 = vmatpush1.bf16.msra.mxu0 0
    %80 = vmatprep.subr.bf16.mxu0 0
    %81 = vmatpush1.bf16.msra.mxu0 0
    %82 = vmatprep.subr.bf16.mxu0 0
    %83 = vmatpush1.bf16.msra.mxu0 0
    %84 = vmatprep.subr.bf16.mxu0 0
    %85 = vmatpush1.bf16.msra.mxu0 0
    %86 = vmatprep.subr.bf16.mxu0 0
    %87 = vmatpush1.bf16.msra.mxu0 0
    %88 = vmatprep.subr.bf16.mxu0 0
    %89 = vmatpush1.bf16.msra.mxu0 0
    %90 = vmatprep.subr.bf16.mxu0 0
    %91 = vmatpush1.bf16.msra.mxu0 0
    %92 = vmatprep.subr.bf16.mxu0 0
    %93 = vmatpush1.bf16.msra.mxu0 0
    %94 = vmatprep.subr.bf16.mxu0 0
    %95 = vmatpush1.bf16.msra.mxu0 0
    %96 = vmatprep.subr.bf16.mxu0 0
    %97 = vmatpush1.bf16.msra.mxu0 0
    %98 = vmatprep.subr.bf16.mxu0 0
    %99 = vmatpush1.bf16.msra.mxu0 0
    %100 = vmatprep.subr.bf16.mxu0 0
    %101 = vmatpush1.bf16.msra.mxu0 0
    %102 = vmatprep.subr.bf16.mxu0 0
    %103 = vmatpush1.bf16.msra.mxu0 0
    %104 = vmatprep.mubr.bf16.mxu0 0
    %105 = vmatmul.mubr.bf16.gmra.mrb[0].mxu0 %v70
    %v106 = vpop.f32.mrb[0].mxu0
    %v107 = vadd.f32 %v61, %v106
    %v108 = vpop.f32.mrb[0].mxu0
    %v109 = vadd.f32 %v65, %v108
    %v110 = vpop.f32.mrb[0].mxu0
    %v111 = vpop.f32.mrb[0].mxu0
    %112 = vdwg.mxu0
    %113 = vst [vmem:[#allocation7] sm:$0xff] %v107
    %114 = vst [vmem:[#allocation7 + $0x8] sm:$0xff] %v109
    // Predicated region
    $region22: #{tpu_custom_call.1} parent=1 // pred_check
      _
    $region23: #{tpu_custom_call.1} parent=1 // pred_check_branch
      %116 = sbr.rel (0) target = $region25
    $region24: #{tpu_custom_call.1} parent=1 // pred_region
      %s118 = ssub.s32 256, 256
      %119 = vsyncadd [#allocation4], %s118
      %s121 = sshll.u32 [#allocation7], 4
      %s122 = int_to_ptr.vmem [resolvable:$true] %s121
      %124 = dma.vmem_to_hbm [thread:$0]  %s122, 256, %s3, [#allocation4]
    $region25: #{tpu_custom_call.1} parent=1 // pred_fallthru
      _
    // Predicated region
    $region26: #{tpu_custom_call.1} parent=1 // pred_check
      _
    $region27: #{tpu_custom_call.1} parent=1 // pred_check_branch
      %126 = sbr.rel (0) target = $region29
    $region28: #{tpu_custom_call.1} parent=1 // pred_region
      %127 = dma.done [#allocation4], 256
    $region29: #{tpu_custom_call.1} parent=1 // pred_fallthru
      _
    %128 = vsyncpa [#allocation3], 1
    %129 = vsyncpa [#allocation6], 1
    %130 = vsyncpa [#allocation4], 1

</llo_original>
